<compile_context>
chip_gen: v7x
topology: tpu7x:2x2x1
jax: 0.10.0
libtpu: 0.0.40
codegen_flags: <defaults>
</compile_context>

<pallas_src>
from functools import partial

import numpy as np
import jax
import jax.numpy as jnp
from jax.experimental import pallas as pl
from jax.experimental.pallas import tpu as pltpu


# ----------------------------------------------------------------------------
# Phase 1: per-batch affine (per-tap MXU accumulation) + ReLU + partial BN stats
# ----------------------------------------------------------------------------
def _tdnn_affine_relu_kernel(x_ref, w_ref, b_ref, y_ref, sum_ref, ssq_ref,
                             *, context_size, dilation):
    # x_ref : (S, D)            mxu_dtype (batch dim squeezed by BlockSpec)
    # w_ref : (cs, D, O_pad)    mxu_dtype
    # b_ref : (1, O_pad)        f32
    # y_ref : (L, O_pad)        f32   un-normalized ReLU output
    # sum_ref, ssq_ref: (1, O_pad) f32 per-batch partial BN statistics
    L, O = y_ref.shape

    # Bias folded into the f32 accumulator init (no extra VPU add later).
    acc = jnp.broadcast_to(b_ref[...].astype(jnp.float32), (L, O))

    # Per-tap 2-D MXU matmuls: (L, D) @ (D, O_pad), f32 accumulation.
    # The unfolded (L, cs*D) tensor is never materialized.
    for c in range(context_size):
        off = c * dilation                               # static tap offset
        xc = x_ref[off:off + L, :]                       # static tap window
        acc = acc + jnp.dot(xc, w_ref[c],
                            preferred_element_type=jnp.float32)

    y = jnp.maximum(acc, 0.0)                            # ReLU in f32
    y_ref[...] = y.astype(y_ref.dtype)

    # Partial BN statistics for this batch element (reduced over time, XLU).
    sum_ref[...] = jnp.sum(y, axis=0, keepdims=True)
    ssq_ref[...] = jnp.sum(y * y, axis=0, keepdims=True)


# ----------------------------------------------------------------------------
# Phase 2: apply BatchNorm  (y - mean) * rsqrt(var + eps)  ==  y*scale + shift
# ----------------------------------------------------------------------------
def _tdnn_bn_apply_kernel(y_ref, scale_ref, shift_ref, o_ref):
    y = y_ref[...]                                       # (L, O_pad) f32
    o_ref[...] = (y * scale_ref[...] + shift_ref[...]).astype(o_ref.dtype)


# ----------------------------------------------------------------------------
# Wrapper (jitted; context_size / dilation / eps / mxu_dtype are static)
# ----------------------------------------------------------------------------
@partial(jax.jit, static_argnames=("context_size", "dilation", "eps",
                                   "mxu_dtype"))
def tdnn_forward(x, w, b, *, context_size, dilation=1, eps=1e-5,
                 mxu_dtype=jnp.bfloat16):
    """x: (B, S, D); w: (context_size*D, O) (pre-transposed Linear weight);
    b: (1, O) or (O,).  Returns (B, L, O) float32, L = S - dilation*(cs-1)."""
    B, S, D = x.shape
    K, O = w.shape
    assert K == context_size * D
    L = S - dilation * (context_size - 1)
    assert L >= 1

    # Lane-dense output: pad output channels to a multiple of 128.
    O_pad = pl.cdiv(O, 128) * 128

    # (K, O) -> (cs, D, O): tap-major ordering matches F.unfold's patch layout.
    w3 = jnp.asarray(w).reshape(context_size, D, O)
    b2 = jnp.asarray(b).reshape(1, O).astype(jnp.float32)
    if O_pad != O:
        w3 = jnp.pad(w3, ((0, 0), (0, 0), (0, O_pad - O)))
        b2 = jnp.pad(b2, ((0, 0), (0, O_pad - O)))
    w3 = w3.astype(mxu_dtype)       # bf16 MXU operands (f32 accumulation)
    x_in = x.astype(mxu_dtype)

    cparams = pltpu.CompilerParams(
        dimension_semantics=("parallel",),       # batch axis -> v7x megacore
        vmem_limit_bytes=48 * 1024 * 1024,       # safe on v5e/v6e/v7x
    )

    # ---- Phase 1: affine + ReLU + per-batch partial BN stats --------------
    kernel1 = partial(_tdnn_affine_relu_kernel,
                      context_size=context_size, dilation=dilation)
    y, psum, pssq = pl.pallas_call(
        kernel1,
        grid=(B,),
        in_specs=[
            pl.BlockSpec((None, S, D), lambda i: (i, 0, 0)),             # x
            pl.BlockSpec((context_size, D, O_pad), lambda i: (0, 0, 0)), # w
            pl.BlockSpec((1, O_pad), lambda i: (0, 0)),                  # bias
        ],
        out_specs=(
            pl.BlockSpec((None, L, O_pad), lambda i: (i, 0, 0)),         # y
            pl.BlockSpec((None, 1, O_pad), lambda i: (i, 0, 0)),         # sum
            pl.BlockSpec((None, 1, O_pad), lambda i: (i, 0, 0)),         # ssq
        ),
        out_shape=(
            jax.ShapeDtypeStruct((B, L, O_pad), jnp.float32),
            jax.ShapeDtypeStruct((B, 1, O_pad), jnp.float32),
            jax.ShapeDtypeStruct((B, 1, O_pad), jnp.float32),
        ),
        compiler_params=cparams,
    )(x_in, w3, b2)

    # ---- Tiny global reduction (O(B*O) work) in plain JAX ------------------
    cnt = jnp.float32(B * L)
    mean = jnp.sum(psum, axis=0) / cnt                       # (1, O_pad)
    var = jnp.maximum(jnp.sum(pssq, axis=0) / cnt - mean * mean, 0.0)
    scale = jax.lax.rsqrt(var + eps)                         # (1, O_pad)
    shift = -mean * scale

    # ---- Phase 2: normalize in place (memory-bound elementwise pass) -------
    out = pl.pallas_call(
        _tdnn_bn_apply_kernel,
        grid=(B,),
        in_specs=[
            pl.BlockSpec((None, L, O_pad), lambda i: (i, 0, 0)),
            pl.BlockSpec((1, O_pad), lambda i: (0, 0)),
            pl.BlockSpec((1, O_pad), lambda i: (0, 0)),
        ],
        out_specs=pl.BlockSpec((None, L, O_pad), lambda i: (i, 0, 0)),
        out_shape=jax.ShapeDtypeStruct((B, L, O_pad), jnp.float32),
        input_output_aliases={0: 0},            # overwrite y's buffer in place
        compiler_params=cparams,
    )(y, scale, shift)

    return out[:, :, :O]


# ----------------------------------------------------------------------------
# Pure-JAX reference matching the PyTorch forward (training-mode BN), f32.
# ----------------------------------------------------------------------------
def tdnn_reference(x, w, b, *, context_size, dilation=1, eps=1e-5):
    B, S, D = x.shape
    L = S - dilation * (context_size - 1)
    u = jnp.concatenate(
        [x[:, c * dilation: c * dilation + L, :] for c in range(context_size)],
        axis=-1,
    ).astype(jnp.float32)
    y = jnp.einsum("blk,ko->blo", u, w,
                   preferred_element_type=jnp.float32) + b.reshape(1, 1, -1)
    y = jnp.maximum(y, 0.0)
    mean = jnp.mean(y, axis=(0, 1), keepdims=True)
    var = jnp.mean((y - mean) ** 2, axis=(0, 1), keepdims=True)
    return (y - mean) * jax.lax.rsqrt(var + eps)


if __name__ == "__main__":
    # Small shapes consistent with the module's forward contract.
    batch = 2
    seq_len = 16
    input_dim = 16
    output_dim = 32
    context_size = 3
    dilation = 1
    K = input_dim * context_size

    key = jax.random.PRNGKey(0)
    kx, kw, kb = jax.random.split(key, 3)

    x = jax.random.normal(kx, (batch, seq_len, input_dim), dtype=jnp.float32)
    bound = 1.0 / np.sqrt(K)
    w = jax.random.uniform(kw, (K, output_dim), jnp.float32, -bound, bound)
    b = jax.random.uniform(kb, (1, output_dim), jnp.float32, -bound, bound)

    expected_L = seq_len - dilation * (context_size - 1)

    ref = jax.block_until_ready(
        tdnn_reference(x, w, b, context_size=context_size, dilation=dilation))

    # Default path: bf16 MXU operands, f32 accumulation + f32 BN statistics.
    out_bf16 = jax.block_until_ready(
        tdnn_forward(x, w, b, context_size=context_size, dilation=dilation))
    assert out_bf16.shape == (batch, expected_L, output_dim), out_bf16.shape
    assert np.allclose(np.asarray(out_bf16), np.asarray(ref),
                       atol=3e-2, rtol=3e-2)

    # f32 MXU path: tight tolerance against the reference.
    out_f32 = jax.block_until_ready(
        tdnn_forward(x, w, b, context_size=context_size, dilation=dilation,
                     mxu_dtype=jnp.float32))
    assert out_f32.shape == (batch, expected_L, output_dim), out_f32.shape
    assert np.allclose(np.asarray(out_f32), np.asarray(ref),
                       atol=1e-3, rtol=1e-3)

    print("KERNEL_OK")
</pallas_src>

<mosaic_0001>
module attributes {stable_mosaic.version = 11 : i64} {
  func.func @_tdnn_bn_apply_kernel(%arg0: i32, %arg1: memref<1x14x128xf32, #tpu.memory_space<vmem>>, %arg2: memref<1x128xf32, #tpu.memory_space<vmem>>, %arg3: memref<1x128xf32, #tpu.memory_space<vmem>>, %arg4: memref<1x14x128xf32, #tpu.memory_space<vmem>>) attributes {dimension_semantics = [#tpu.dimension_semantics<parallel>], iteration_bounds = array<i64: 2>, scalar_prefetch = 0 : i64, scratch_operands = 0 : i64, tpu.core_type = #tpu.core_type<tc>, window_params = [{transform_indices = @transform_0, window_bounds = array<i64: 1, 14, 128>}, {pipeline_mode = #tpu.pipeline_mode<synchronous>, transform_indices = @transform_1, window_bounds = array<i64: 1, 128>}, {pipeline_mode = #tpu.pipeline_mode<synchronous>, transform_indices = @transform_2, window_bounds = array<i64: 1, 128>}, {transform_indices = @transform_3, window_bounds = array<i64: 1, 14, 128>}]} {
    %c0 = arith.constant 0 : index
    %c0_0 = arith.constant 0 : index
    %c0_1 = arith.constant 0 : index
    %0 = vector.load %arg1[%c0, %c0_0, %c0_1] : memref<1x14x128xf32, #tpu.memory_space<vmem>>, vector<1x14x128xf32>
    %1 = vector.shape_cast %0 : vector<1x14x128xf32> to vector<14x128xf32>
    %c0_2 = arith.constant 0 : index
    %c0_3 = arith.constant 0 : index
    %2 = vector.load %arg2[%c0_2, %c0_3] : memref<1x128xf32, #tpu.memory_space<vmem>>, vector<1x128xf32>
    %3 = vector.broadcast %2 : vector<1x128xf32> to vector<14x128xf32>
    %4 = arith.mulf %1, %3 : vector<14x128xf32>
    %c0_4 = arith.constant 0 : index
    %c0_5 = arith.constant 0 : index
    %5 = vector.load %arg3[%c0_4, %c0_5] : memref<1x128xf32, #tpu.memory_space<vmem>>, vector<1x128xf32>
    %6 = vector.broadcast %5 : vector<1x128xf32> to vector<14x128xf32>
    %7 = arith.addf %4, %6 : vector<14x128xf32>
    %c0_6 = arith.constant 0 : index
    %c0_7 = arith.constant 0 : index
    %c0_8 = arith.constant 0 : index
    %8 = vector.load %arg4[%c0_6, %c0_7, %c0_8] : memref<1x14x128xf32, #tpu.memory_space<vmem>>, vector<1x14x128xf32>
    %9 = vector.shape_cast %8 : vector<1x14x128xf32> to vector<14x128xf32>
    %10 = vector.shape_cast %7 : vector<14x128xf32> to vector<1x14x128xf32>
    tpu.vector_store %arg4[%c0_6, %c0_7, %c0_8], %10 {strides = array<i32>} : memref<1x14x128xf32, #tpu.memory_space<vmem>>, vector<1x14x128xf32>,
    return
  }
  func.func @transform_0(%arg0: i32) -> (i32, i32, i32) {
    %c0_i32 = arith.constant 0 : i32
    %c0_i32_0 = arith.constant 0 : i32
    %c0_i32_1 = arith.constant 0 : i32
    return %arg0, %c0_i32, %c0_i32_0 : i32, i32, i32
  }
  func.func @transform_1(%arg0: i32) -> (i32, i32) {
    %c0_i32 = arith.constant 0 : i32
    %c0_i32_0 = arith.constant 0 : i32
    %c0_i32_1 = arith.constant 0 : i32
    return %c0_i32, %c0_i32_0 : i32, i32
  }
  func.func @transform_2(%arg0: i32) -> (i32, i32) {
    %c0_i32 = arith.constant 0 : i32
    %c0_i32_0 = arith.constant 0 : i32
    %c0_i32_1 = arith.constant 0 : i32
    return %c0_i32, %c0_i32_0 : i32, i32
  }
  func.func @transform_3(%arg0: i32) -> (i32, i32, i32) {
    %c0_i32 = arith.constant 0 : i32
    %c0_i32_0 = arith.constant 0 : i32
    %c0_i32_1 = arith.constant 0 : i32
    return %arg0, %c0_i32, %c0_i32_0 : i32, i32, i32
  }
}

module attributes {stable_mosaic.version = 11 : i64} {
  func.func @_tdnn_affine_relu_kernel(%arg0: i32, %arg1: memref<1x16x16xbf16, #tpu.memory_space<vmem>>, %arg2: memref<3x16x128xbf16, #tpu.memory_space<vmem>>, %arg3: memref<1x128xf32, #tpu.memory_space<vmem>>, %arg4: memref<1x14x128xf32, #tpu.memory_space<vmem>>, %arg5: memref<1x1x128xf32, #tpu.memory_space<vmem>>, %arg6: memref<1x1x128xf32, #tpu.memory_space<vmem>>) attributes {dimension_semantics = [#tpu.dimension_semantics<parallel>], iteration_bounds = array<i64: 2>, scalar_prefetch = 0 : i64, scratch_operands = 0 : i64, tpu.core_type = #tpu.core_type<tc>, window_params = [{transform_indices = @transform_0, window_bounds = array<i64: 1, 16, 16>}, {pipeline_mode = #tpu.pipeline_mode<synchronous>, transform_indices = @transform_1, window_bounds = array<i64: 3, 16, 128>}, {pipeline_mode = #tpu.pipeline_mode<synchronous>, transform_indices = @transform_2, window_bounds = array<i64: 1, 128>}, {transform_indices = @transform_3, window_bounds = array<i64: 1, 14, 128>}, {transform_indices = @transform_4, window_bounds = array<i64: 1, 1, 128>}, {transform_indices = @transform_5, window_bounds = array<i64: 1, 1, 128>}]} {
    %c0 = arith.constant 0 : index
    %c0_0 = arith.constant 0 : index
    %0 = vector.load %arg3[%c0, %c0_0] : memref<1x128xf32, #tpu.memory_space<vmem>>, vector<1x128xf32>
    %1 = vector.shape_cast %0 : vector<1x128xf32> to vector<1x128xf32>
    %2 = vector.broadcast %1 : vector<1x128xf32> to vector<14x128xf32>
    %c0_1 = arith.constant 0 : index
    %c0_2 = arith.constant 0 : index
    %c0_3 = arith.constant 0 : index
    %3 = vector.load %arg1[%c0_1, %c0_2, %c0_3] : memref<1x16x16xbf16, #tpu.memory_space<vmem>>, vector<1x14x16xbf16>
    %4 = vector.shape_cast %3 : vector<1x14x16xbf16> to vector<14x16xbf16>
    %c0_4 = arith.constant 0 : index
    %c0_5 = arith.constant 0 : index
    %c0_6 = arith.constant 0 : index
    %5 = vector.load %arg2[%c0_4, %c0_5, %c0_6] : memref<3x16x128xbf16, #tpu.memory_space<vmem>>, vector<1x16x128xbf16>
    %6 = vector.shape_cast %5 : vector<1x16x128xbf16> to vector<16x128xbf16>
    %cst = arith.constant dense<0.000000e+00> : vector<14x128xf32>
    %7 = tpu.matmul %4, %6, %cst {dimension_numbers = #tpu.dot_dimension_numbers<[1], [0], [0], [1], [0, 0, 1, 1], [], []>} : vector<14x16xbf16>, vector<16x128xbf16>, vector<14x128xf32> -> vector<14x128xf32>
    %8 = arith.addf %2, %7 : vector<14x128xf32>
    %c0_7 = arith.constant 0 : index
    %c1 = arith.constant 1 : index
    %c0_8 = arith.constant 0 : index
    %9 = vector.load %arg1[%c0_7, %c1, %c0_8] : memref<1x16x16xbf16, #tpu.memory_space<vmem>>, vector<1x14x16xbf16>
    %10 = vector.shape_cast %9 : vector<1x14x16xbf16> to vector<14x16xbf16>
    %c1_9 = arith.constant 1 : index
    %c0_10 = arith.constant 0 : index
    %c0_11 = arith.constant 0 : index
    %11 = vector.load %arg2[%c1_9, %c0_10, %c0_11] : memref<3x16x128xbf16, #tpu.memory_space<vmem>>, vector<1x16x128xbf16>
    %12 = vector.shape_cast %11 : vector<1x16x128xbf16> to vector<16x128xbf16>
    %cst_12 = arith.constant dense<0.000000e+00> : vector<14x128xf32>
    %13 = tpu.matmul %10, %12, %cst_12 {dimension_numbers = #tpu.dot_dimension_numbers<[1], [0], [0], [1], [0, 0, 1, 1], [], []>} : vector<14x16xbf16>, vector<16x128xbf16>, vector<14x128xf32> -> vector<14x128xf32>
    %14 = arith.addf %8, %13 : vector<14x128xf32>
    %c0_13 = arith.constant 0 : index
    %c2 = arith.constant 2 : index
    %c0_14 = arith.constant 0 : index
    %15 = vector.load %arg1[%c0_13, %c2, %c0_14] : memref<1x16x16xbf16, #tpu.memory_space<vmem>>, vector<1x14x16xbf16>
    %16 = vector.shape_cast %15 : vector<1x14x16xbf16> to vector<14x16xbf16>
    %c2_15 = arith.constant 2 : index
    %c0_16 = arith.constant 0 : index
    %c0_17 = arith.constant 0 : index
    %17 = vector.load %arg2[%c2_15, %c0_16, %c0_17] : memref<3x16x128xbf16, #tpu.memory_space<vmem>>, vector<1x16x128xbf16>
    %18 = vector.shape_cast %17 : vector<1x16x128xbf16> to vector<16x128xbf16>
    %cst_18 = arith.constant dense<0.000000e+00> : vector<14x128xf32>
    %19 = tpu.matmul %16, %18, %cst_18 {dimension_numbers = #tpu.dot_dimension_numbers<[1], [0], [0], [1], [0, 0, 1, 1], [], []>} : vector<14x16xbf16>, vector<16x128xbf16>, vector<14x128xf32> -> vector<14x128xf32>
    %20 = arith.addf %14, %19 : vector<14x128xf32>
    %cst_19 = arith.constant 0.000000e+00 : f32
    %21 = vector.broadcast %cst_19 : f32 to vector<14x128xf32>
    %22 = arith.maximumf %20, %21 : vector<14x128xf32>
    %c0_20 = arith.constant 0 : index
    %c0_21 = arith.constant 0 : index
    %c0_22 = arith.constant 0 : index
    %23 = vector.load %arg4[%c0_20, %c0_21, %c0_22] : memref<1x14x128xf32, #tpu.memory_space<vmem>>, vector<1x14x128xf32>
    %24 = vector.shape_cast %23 : vector<1x14x128xf32> to vector<14x128xf32>
    %25 = vector.shape_cast %22 : vector<14x128xf32> to vector<1x14x128xf32>
    tpu.vector_store %arg4[%c0_20, %c0_21, %c0_22], %25 {strides = array<i32>} : memref<1x14x128xf32, #tpu.memory_space<vmem>>, vector<1x14x128xf32>,
    %cst_23 = arith.constant dense<0.000000e+00> : vector<128xf32>
    %26 = vector.multi_reduction <add>, %22, %cst_23 [0] : vector<14x128xf32> to vector<128xf32>
    %27 = vector.shape_cast %26 : vector<128xf32> to vector<1x128xf32>
    %c0_24 = arith.constant 0 : index
    %c0_25 = arith.constant 0 : index
    %c0_26 = arith.constant 0 : index
    %28 = vector.load %arg5[%c0_24, %c0_25, %c0_26] : memref<1x1x128xf32, #tpu.memory_space<vmem>>, vector<1x1x128xf32>
    %29 = vector.shape_cast %28 : vector<1x1x128xf32> to vector<1x128xf32>
    %30 = vector.shape_cast %27 : vector<1x128xf32> to vector<1x1x128xf32>
    tpu.vector_store %arg5[%c0_24, %c0_25, %c0_26], %30 {strides = array<i32>} : memref<1x1x128xf32, #tpu.memory_space<vmem>>, vector<1x1x128xf32>,
    %31 = arith.mulf %22, %22 : vector<14x128xf32>
    %cst_27 = arith.constant dense<0.000000e+00> : vector<128xf32>
    %32 = vector.multi_reduction <add>, %31, %cst_27 [0] : vector<14x128xf32> to vector<128xf32>
    %33 = vector.shape_cast %32 : vector<128xf32> to vector<1x128xf32>
    %c0_28 = arith.constant 0 : index
    %c0_29 = arith.constant 0 : index
    %c0_30 = arith.constant 0 : index
    %34 = vector.load %arg6[%c0_28, %c0_29, %c0_30] : memref<1x1x128xf32, #tpu.memory_space<vmem>>, vector<1x1x128xf32>
    %35 = vector.shape_cast %34 : vector<1x1x128xf32> to vector<1x128xf32>
    %36 = vector.shape_cast %33 : vector<1x128xf32> to vector<1x1x128xf32>
    tpu.vector_store %arg6[%c0_28, %c0_29, %c0_30], %36 {strides = array<i32>} : memref<1x1x128xf32, #tpu.memory_space<vmem>>, vector<1x1x128xf32>,
    return
  }
  func.func @transform_0(%arg0: i32) -> (i32, i32, i32) {
    %c0_i32 = arith.constant 0 : i32
    %c0_i32_0 = arith.constant 0 : i32
    %c0_i32_1 = arith.constant 0 : i32
    return %arg0, %c0_i32, %c0_i32_0 : i32, i32, i32
  }
  func.func @transform_1(%arg0: i32) -> (i32, i32, i32) {
    %c0_i32 = arith.constant 0 : i32
    %c0_i32_0 = arith.constant 0 : i32
    %c0_i32_1 = arith.constant 0 : i32
    %c0_i32_2 = arith.constant 0 : i32
    return %c0_i32, %c0_i32_0, %c0_i32_1 : i32, i32, i32
  }
  func.func @transform_2(%arg0: i32) -> (i32, i32) {
    %c0_i32 = arith.constant 0 : i32
    %c0_i32_0 = arith.constant 0 : i32
    %c0_i32_1 = arith.constant 0 : i32
    return %c0_i32, %c0_i32_0 : i32, i32
  }
  func.func @transform_3(%arg0: i32) -> (i32, i32, i32) {
    %c0_i32 = arith.constant 0 : i32
    %c0_i32_0 = arith.constant 0 : i32
    %c0_i32_1 = arith.constant 0 : i32
    return %arg0, %c0_i32, %c0_i32_0 : i32, i32, i32
  }
  func.func @transform_4(%arg0: i32) -> (i32, i32, i32) {
    %c0_i32 = arith.constant 0 : i32
    %c0_i32_0 = arith.constant 0 : i32
    %c0_i32_1 = arith.constant 0 : i32
    return %arg0, %c0_i32, %c0_i32_0 : i32, i32, i32
  }
  func.func @transform_5(%arg0: i32) -> (i32, i32, i32) {
    %c0_i32 = arith.constant 0 : i32
    %c0_i32_0 = arith.constant 0 : i32
    %c0_i32_1 = arith.constant 0 : i32
    return %arg0, %c0_i32, %c0_i32_0 : i32, i32, i32
  }
}

</mosaic_0001>

<llo_original>
// kernel: tdnn_forward.3
$region0: #{tdnn_forward.3}
  #allocation0 [shape = 'u32[]', space=smem, size = 0x4, offset = 0x4, fixed_abs, tag = 'smem constant byte address 0x4 - core index']
  #allocation1 [shape = 'u32[144,128]{1,0:T(1,128)}', space=vmem, size = 0x12000, scoped, tag = 'internal scratch']
  %s0 = inlined_call_operand.vmem [shape: f32[2,14,128], index: 0, kind: input, shape index: {}, may-alias: {0,3}]
  %s1 = inlined_call_operand.vmem [shape: f32[1,128], index: 1, kind: input, shape index: {}]
  %s2 = inlined_call_operand.vmem [shape: f32[1,128], index: 2, kind: input, shape index: {}]
  %s3 = inlined_call_operand.vmem [shape: f32[2,14,128], index: 3, kind: output, shape index: {}, may-alias: {0,3}]
  %s4 = sld [smem:[#allocation0]]
  $region45: #{tdnn_forward.3} parent=0
    _
  %s6 = ssub.s32 1, %s4
  %s7 = scalar_select 0, %s6, %s4
  loop: start=0, step=1, limit=4
  $region2: #{tdnn_forward.3} parent=0 // loop_pre_header
    _
  $region3: #{tdnn_forward.3} parent=0 // loop_header
    %s9 = sphi 0, %s13
    %p10 = scmp.ge.s32.totalorder %s9, 4
    %s19 = sphi 0, %s21
    %s22 = sphi 0, %s19
    %s23 = sphi 0, %s22
    %s39 = sphi 0, %s23
    %s43 = sphi 0, %s43
    %s45 = sphi 0, %s43
    %s46 = sphi 0, %s45
    %s60 = sphi 0, %s46
    %s64 = sphi 0, %s64
    %s66 = sphi 0, %s64
    %s67 = sphi 0, %s66
    %s81 = sphi 0, %s67
    %s87 = sphi 0, %s89
    %s90 = sphi 0, %s87
    %s91 = sphi 0, %s90
    %s107 = sphi 0, %s91
  $region4: #{tdnn_forward.3} parent=0 // loop_header_branch
    %12 = sbr.rel (%p10) target = $region8
  $region5: #{tdnn_forward.3} parent=0 // loop_body
    %s14 = ssub.s32 %s9, 1
    %s15 = ssub.s32 %s9, 2
    %s16 = sadd.s32 %s9, 1
    %s17 = ssub.s32 %s9, %s16
    %p18 = scmp.eq.s32.totalorder %s17, 0
    %s20 = sadd.s32 %s19, 1
    %s21 = scalar_select %p18, %s19, %s20
    %p24 = pneg %p18
    %p25 = scmp.eq.s32.totalorder %s9, 1
    %p26 = por %p24, %p25
    %p27 = scmp.ne.s32.totalorder %s19, %s22
    %p28 = scmp.eq.s32.totalorder %s9, 0
    %p29 = por %p27, %p28
    %p30 = scmp.ne.s32.totalorder %s19, %s22
    %p31 = scmp.eq.s32.totalorder %s14, 1
    %p32 = por %p30, %p31
    %p33 = scmp.ne.s32.totalorder %s22, %s23
    %p34 = scmp.eq.s32.totalorder %s14, 0
    %p35 = por %p33, %p34
    %p36 = scmp.ne.s32.totalorder %s22, %s23
    %p37 = scmp.eq.s32.totalorder %s15, 1
    %p38 = por %p36, %p37
    %p40 = scmp.ne.s32.totalorder %s23, %s39
    %p41 = scmp.eq.s32.totalorder %s15, 0
    %p42 = por %p40, %p41
    %s44 = sadd.s32 %s43, 1
    %p47 = scmp.eq.s32.totalorder %s9, 1
    %p48 = scmp.ne.s32.totalorder %s43, %s45
    %p49 = scmp.eq.s32.totalorder %s9, 0
    %p50 = por %p48, %p49
    %p51 = scmp.ne.s32.totalorder %s43, %s45
    %p52 = scmp.eq.s32.totalorder %s14, 1
    %p53 = por %p51, %p52
    %p54 = scmp.ne.s32.totalorder %s45, %s46
    %p55 = scmp.eq.s32.totalorder %s14, 0
    %p56 = por %p54, %p55
    %p57 = scmp.ne.s32.totalorder %s45, %s46
    %p58 = scmp.eq.s32.totalorder %s15, 1
    %p59 = por %p57, %p58
    %p61 = scmp.ne.s32.totalorder %s46, %s60
    %p62 = scmp.eq.s32.totalorder %s15, 0
    %p63 = por %p61, %p62
    %s65 = sadd.s32 %s64, 1
    %p68 = scmp.eq.s32.totalorder %s9, 1
    %p69 = scmp.ne.s32.totalorder %s64, %s66
    %p70 = scmp.eq.s32.totalorder %s9, 0
    %p71 = por %p69, %p70
    %p72 = scmp.ne.s32.totalorder %s64, %s66
    %p73 = scmp.eq.s32.totalorder %s14, 1
    %p74 = por %p72, %p73
    %p75 = scmp.ne.s32.totalorder %s66, %s67
    %p76 = scmp.eq.s32.totalorder %s14, 0
    %p77 = por %p75, %p76
    %p78 = scmp.ne.s32.totalorder %s66, %s67
    %p79 = scmp.eq.s32.totalorder %s15, 1
    %p80 = por %p78, %p79
    %p82 = scmp.ne.s32.totalorder %s67, %s81
    %p83 = scmp.eq.s32.totalorder %s15, 0
    %p84 = por %p82, %p83
    %s85 = ssub.s32 %s9, %s16
    %p86 = scmp.eq.s32.totalorder %s85, 0
    %s88 = sadd.s32 %s87, 1
    %s89 = scalar_select %p86, %s87, %s88
    %p92 = pneg %p86
    %p93 = scmp.eq.s32.totalorder %s9, 1
    %p94 = por %p92, %p93
    %p95 = scmp.ne.s32.totalorder %s87, %s90
    %p96 = scmp.eq.s32.totalorder %s9, 0
    %p97 = por %p95, %p96
    %p98 = scmp.ne.s32.totalorder %s87, %s90
    %p99 = scmp.eq.s32.totalorder %s14, 1
    %p100 = por %p98, %p99
    %p101 = scmp.ne.s32.totalorder %s90, %s91
    %p102 = scmp.eq.s32.totalorder %s14, 0
    %p103 = por %p101, %p102
    %p104 = scmp.ne.s32.totalorder %s90, %s91
    %p105 = scmp.eq.s32.totalorder %s15, 1
    %p106 = por %p104, %p105
    %p108 = scmp.ne.s32.totalorder %s91, %s107
    %p109 = scmp.eq.s32.totalorder %s15, 0
    %p110 = por %p108, %p109
    %p111 = scmp.le.s32.totalorder 1, %s9
    %p112 = scmp.lt.s32.totalorder %s9, 3
    %p113 = pnand %p111, %p112
    %p114 = pneg %p113
    // Predicated region
    $region9: #{tdnn_forward.3} parent=5 // pred_check
      _
    $region10: #{tdnn_forward.3} parent=5 // pred_check_branch
      %116 = sbr.rel (%p113) target = $region12
    $region11: #{tdnn_forward.3} parent=5 // pred_region
      %s117 = ssub.s32 %s9, 1
      // Predicated region
      $region13: #{tdnn_forward.3} parent=11 // pred_check
        %p118 = pneg %p56
      $region14: #{tdnn_forward.3} parent=11 // pred_check_branch
        %120 = sbr.rel (%p118) target = $region16
      $region15: #{tdnn_forward.3} parent=11 // pred_region
        _
      $region16: #{tdnn_forward.3} parent=11 // pred_fallthru
        _
      // Predicated region
      $region17: #{tdnn_forward.3} parent=11 // pred_check
        %p121 = pneg %p77
      $region18: #{tdnn_forward.3} parent=11 // pred_check_branch
        %123 = sbr.rel (%p121) target = $region20
      $region19: #{tdnn_forward.3} parent=11 // pred_region
        _
      $region20: #{tdnn_forward.3} parent=11 // pred_fallthru
        _
    $region12: #{tdnn_forward.3} parent=5 // pred_fallthru
      _
    %p124 = scmp.lt.s32.totalorder %s9, 2
    // Predicated region
    $region21: #{tdnn_forward.3} parent=5 // pred_check
      %p125 = pneg %p124
    $region22: #{tdnn_forward.3} parent=5 // pred_check_branch
      %127 = sbr.rel (%p125) target = $region24
    $region23: #{tdnn_forward.3} parent=5 // pred_region
      // Predicated region
      $region25: #{tdnn_forward.3} parent=23 // pred_check
        %p128 = pneg %p29
      $region26: #{tdnn_forward.3} parent=23 // pred_check_branch
        %130 = sbr.rel (%p128) target = $region28
      $region27: #{tdnn_forward.3} parent=23 // pred_region
        %p131 = scmp.lt.s32.totalorder %s9, 1
        %s132 = scalar_select %p131, %s9, 1
        %s133 = smul.addr %s132, 2
        %s134 = smul.addr %s133, 8
        %s135 = scalar_lea.vmem %s0, %s134
      $region28: #{tdnn_forward.3} parent=23 // pred_fallthru
        _
    $region24: #{tdnn_forward.3} parent=5 // pred_fallthru
      _
    %p136 = scmp.le.s32.totalorder 1, %s9
    %p137 = scmp.lt.s32.totalorder %s9, 3
    %p138 = pnand %p136, %p137
    %p139 = pneg %p138
    // Predicated region
    $region29: #{tdnn_forward.3} parent=5 // pred_check
      _
    $region30: #{tdnn_forward.3} parent=5 // pred_check_branch
      %141 = sbr.rel (%p138) target = $region32
    $region31: #{tdnn_forward.3} parent=5 // pred_region
      %s142 = ssub.s32 %s9, 1
      %p143 = scmp.lt.s32.totalorder %s14, 1
      %s144 = scalar_select %p143, %s14, 1
      %s145 = smul.addr %s144, 2
      %s146 = smul.addr %s145, 8
      %s147 = scalar_lea.vmem %s0, %s146
      %p148 = pneg %p35
      %p149 = pneg %p32
      %p150 = pneg %p56
      %p151 = pneg %p53
      %p152 = pneg %p77
      %p153 = pneg %p74
      %p154 = pneg %p103
      %p155 = pneg %p100
      %p156 = scmp.lt.s32.totalorder %s14, 1
      %s157 = scalar_select %p156, %s14, 1
      %s158 = smul.addr %s157, 2
      %s159 = smul.addr %s158, 8
      %s160 = scalar_lea.vmem %s3, %s159
      %p161 = scmp.lt.s32.totalorder %s14, 1
      %s162 = scalar_select %p161, %s14, 1
      %s163 = smul.addr %s162, 2
      %s164 = smul.addr %s163, 8
      %s165 = scalar_lea.vmem %s0, %s164
      %p166 = scmp.lt.s32.totalorder %s14, 1
      %s167 = scalar_select %p166, %s14, 1
      %s168 = smul.addr %s167, 2
      %s169 = smul.addr %s168, 8
      %s170 = scalar_lea.vmem %s3, %s169
      %v171 = vld [vmem:[%s165] sm:$0xff]
      %v172 = vld [vmem:[%s165 + $0x8] sm:$0x3f]
      %v173 = vld [vmem:[%s1] sm:$0x1]
      %v175 = vlaneseq
      %v176 = vshrl.u32 %v175, 7
      %v177 = vsub.s32 0, %v176
      %v178 = vrot.slane %v173, %v177
      %v180 = vmul.f32 %v171, %v178
      %v181 = vmul.f32 %v172, %v178
      %v182 = vld [vmem:[%s2] sm:$0x1]
      %v184 = vlaneseq
      %v185 = vshrl.u32 %v184, 7
      %v186 = vsub.s32 0, %v185
      %v187 = vrot.slane %v182, %v186
      %v189 = vadd.f32 %v180, %v187
      %v190 = vadd.f32 %v181, %v187
      %191 = vst [vmem:[%s170] sm:$0xff] %v189
      %192 = vst [vmem:[%s170 + $0x8] sm:$0x3f] %v190
      %p193 = scmp.lt.s32.totalorder %s14, 1
      %s194 = scalar_select %p193, %s14, 1
      %s195 = smul.addr %s194, 2
      %s196 = smul.addr %s195, 8
      %s197 = scalar_lea.vmem %s3, %s196
      // Predicated region
      $region33: #{tdnn_forward.3} parent=31 // pred_check
        %p198 = pneg %p100
      $region34: #{tdnn_forward.3} parent=31 // pred_check_branch
        %200 = sbr.rel (%p198) target = $region36
      $region35: #{tdnn_forward.3} parent=31 // pred_region
        _
      $region36: #{tdnn_forward.3} parent=31 // pred_fallthru
        _
    $region32: #{tdnn_forward.3} parent=5 // pred_fallthru
      _
    %p201 = scmp.le.s32.totalorder 2, %s9
    // Predicated region
    $region37: #{tdnn_forward.3} parent=5 // pred_check
      %p202 = pneg %p201
    $region38: #{tdnn_forward.3} parent=5 // pred_check_branch
      %204 = sbr.rel (%p202) target = $region40
    $region39: #{tdnn_forward.3} parent=5 // pred_region
      %s205 = ssub.s32 %s9, 2
      // Predicated region
      $region41: #{tdnn_forward.3} parent=39 // pred_check
        %p206 = pneg %p106
      $region42: #{tdnn_forward.3} parent=39 // pred_check_branch
        %208 = sbr.rel (%p206) target = $region44
      $region43: #{tdnn_forward.3} parent=39 // pred_region
        %p209 = scmp.lt.s32.totalorder %s15, 1
        %s210 = scalar_select %p209, %s15, 1
        %s211 = smul.addr %s210, 2
        %s212 = smul.addr %s211, 8
        %s213 = scalar_lea.vmem %s3, %s212
      $region44: #{tdnn_forward.3} parent=39 // pred_fallthru
        _
    $region40: #{tdnn_forward.3} parent=5 // pred_fallthru
      _
  $region6: #{tdnn_forward.3} parent=0 // loop_footer
    %s13 = sadd.s32 1, %s9
  $region7: #{tdnn_forward.3} parent=0 // loop_footer_branch
    %8 = sbr.rel target = $region3
  $region8: #{tdnn_forward.3} parent=0 // loop_exit
    _

// kernel: tdnn_forward.2
$region0: #{tdnn_forward.2}
  #allocation0 [shape = 'u32[]', space=smem, size = 0x4, offset = 0x4, fixed_abs, tag = 'smem constant byte address 0x4 - core index']
  #allocation1 [shape = 'u32[144,128]{1,0:T(1,128)}', space=vmem, size = 0x12000, scoped, tag = 'internal scratch']
  %s0 = inlined_call_operand.vmem [shape: bf16[2,16,16], index: 0, kind: input, shape index: {}]
  %s1 = inlined_call_operand.vmem [shape: bf16[3,16,128], index: 1, kind: input, shape index: {}]
  %s2 = inlined_call_operand.vmem [shape: f32[1,128], index: 2, kind: input, shape index: {}]
  %s3 = inlined_call_operand.vmem [shape: f32[2,14,128], index: 3, kind: output, shape index: {0}]
  %s4 = inlined_call_operand.vmem [shape: f32[2,1,128], index: 4, kind: output, shape index: {1}]
  %s5 = inlined_call_operand.vmem [shape: f32[2,1,128], index: 5, kind: output, shape index: {2}]
  %6 = xla_tuple %s3, %s4, %s5
  %s7 = sld [smem:[#allocation0]]
  $region61: #{tdnn_forward.2} parent=0
    _
  %s9 = ssub.s32 1, %s7
  %s10 = scalar_select 0, %s9, %s7
  loop: start=0, step=1, limit=4
  $region2: #{tdnn_forward.2} parent=0 // loop_pre_header
    _
  $region3: #{tdnn_forward.2} parent=0 // loop_header
    %s12 = sphi 0, %s16
    %p13 = scmp.ge.s32.totalorder %s12, 4
    %s22 = sphi 0, %s24
    %s25 = sphi 0, %s22
    %s26 = sphi 0, %s25
    %s42 = sphi 0, %s26
    %s46 = sphi 0, %s46
    %s48 = sphi 0, %s46
    %s49 = sphi 0, %s48
    %s63 = sphi 0, %s49
    %s67 = sphi 0, %s67
    %s69 = sphi 0, %s67
    %s70 = sphi 0, %s69
    %s84 = sphi 0, %s70
    %s90 = sphi 0, %s92
    %s93 = sphi 0, %s90
    %s94 = sphi 0, %s93
    %s110 = sphi 0, %s94
    %s116 = sphi 0, %s118
    %s119 = sphi 0, %s116
    %s120 = sphi 0, %s119
    %s136 = sphi 0, %s120
    %s142 = sphi 0, %s144
    %s145 = sphi 0, %s142
    %s146 = sphi 0, %s145
    %s162 = sphi 0, %s146
  $region4: #{tdnn_forward.2} parent=0 // loop_header_branch
    %15 = sbr.rel (%p13) target = $region8
  $region5: #{tdnn_forward.2} parent=0 // loop_body
    %s17 = ssub.s32 %s12, 1
    %s18 = ssub.s32 %s12, 2
    %s19 = sadd.s32 %s12, 1
    %s20 = ssub.s32 %s12, %s19
    %p21 = scmp.eq.s32.totalorder %s20, 0
    %s23 = sadd.s32 %s22, 1
    %s24 = scalar_select %p21, %s22, %s23
    %p27 = pneg %p21
    %p28 = scmp.eq.s32.totalorder %s12, 1
    %p29 = por %p27, %p28
    %p30 = scmp.ne.s32.totalorder %s22, %s25
    %p31 = scmp.eq.s32.totalorder %s12, 0
    %p32 = por %p30, %p31
    %p33 = scmp.ne.s32.totalorder %s22, %s25
    %p34 = scmp.eq.s32.totalorder %s17, 1
    %p35 = por %p33, %p34
    %p36 = scmp.ne.s32.totalorder %s25, %s26
    %p37 = scmp.eq.s32.totalorder %s17, 0
    %p38 = por %p36, %p37
    %p39 = scmp.ne.s32.totalorder %s25, %s26
    %p40 = scmp.eq.s32.totalorder %s18, 1
    %p41 = por %p39, %p40
    %p43 = scmp.ne.s32.totalorder %s26, %s42
    %p44 = scmp.eq.s32.totalorder %s18, 0
    %p45 = por %p43, %p44
    %s47 = sadd.s32 %s46, 1
    %p50 = scmp.eq.s32.totalorder %s12, 1
    %p51 = scmp.ne.s32.totalorder %s46, %s48
    %p52 = scmp.eq.s32.totalorder %s12, 0
    %p53 = por %p51, %p52
    %p54 = scmp.ne.s32.totalorder %s46, %s48
    %p55 = scmp.eq.s32.totalorder %s17, 1
    %p56 = por %p54, %p55
    %p57 = scmp.ne.s32.totalorder %s48, %s49
    %p58 = scmp.eq.s32.totalorder %s17, 0
    %p59 = por %p57, %p58
    %p60 = scmp.ne.s32.totalorder %s48, %s49
    %p61 = scmp.eq.s32.totalorder %s18, 1
    %p62 = por %p60, %p61
    %p64 = scmp.ne.s32.totalorder %s49, %s63
    %p65 = scmp.eq.s32.totalorder %s18, 0
    %p66 = por %p64, %p65
    %s68 = sadd.s32 %s67, 1
    %p71 = scmp.eq.s32.totalorder %s12, 1
    %p72 = scmp.ne.s32.totalorder %s67, %s69
    %p73 = scmp.eq.s32.totalorder %s12, 0
    %p74 = por %p72, %p73
    %p75 = scmp.ne.s32.totalorder %s67, %s69
    %p76 = scmp.eq.s32.totalorder %s17, 1
    %p77 = por %p75, %p76
    %p78 = scmp.ne.s32.totalorder %s69, %s70
    %p79 = scmp.eq.s32.totalorder %s17, 0
    %p80 = por %p78, %p79
    %p81 = scmp.ne.s32.totalorder %s69, %s70
    %p82 = scmp.eq.s32.totalorder %s18, 1
    %p83 = por %p81, %p82
    %p85 = scmp.ne.s32.totalorder %s70, %s84
    %p86 = scmp.eq.s32.totalorder %s18, 0
    %p87 = por %p85, %p86
    %s88 = ssub.s32 %s12, %s19
    %p89 = scmp.eq.s32.totalorder %s88, 0
    %s91 = sadd.s32 %s90, 1
    %s92 = scalar_select %p89, %s90, %s91
    %p95 = pneg %p89
    %p96 = scmp.eq.s32.totalorder %s12, 1
    %p97 = por %p95, %p96
    %p98 = scmp.ne.s32.totalorder %s90, %s93
    %p99 = scmp.eq.s32.totalorder %s12, 0
    %p100 = por %p98, %p99
    %p101 = scmp.ne.s32.totalorder %s90, %s93
    %p102 = scmp.eq.s32.totalorder %s17, 1
    %p103 = por %p101, %p102
    %p104 = scmp.ne.s32.totalorder %s93, %s94
    %p105 = scmp.eq.s32.totalorder %s17, 0
    %p106 = por %p104, %p105
    %p107 = scmp.ne.s32.totalorder %s93, %s94
    %p108 = scmp.eq.s32.totalorder %s18, 1
    %p109 = por %p107, %p108
    %p111 = scmp.ne.s32.totalorder %s94, %s110
    %p112 = scmp.eq.s32.totalorder %s18, 0
    %p113 = por %p111, %p112
    %s114 = ssub.s32 %s12, %s19
    %p115 = scmp.eq.s32.totalorder %s114, 0
    %s117 = sadd.s32 %s116, 1
    %s118 = scalar_select %p115, %s116, %s117
    %p121 = pneg %p115
    %p122 = scmp.eq.s32.totalorder %s12, 1
    %p123 = por %p121, %p122
    %p124 = scmp.ne.s32.totalorder %s116, %s119
    %p125 = scmp.eq.s32.totalorder %s12, 0
    %p126 = por %p124, %p125
    %p127 = scmp.ne.s32.totalorder %s116, %s119
    %p128 = scmp.eq.s32.totalorder %s17, 1
    %p129 = por %p127, %p128
    %p130 = scmp.ne.s32.totalorder %s119, %s120
    %p131 = scmp.eq.s32.totalorder %s17, 0
    %p132 = por %p130, %p131
    %p133 = scmp.ne.s32.totalorder %s119, %s120
    %p134 = scmp.eq.s32.totalorder %s18, 1
    %p135 = por %p133, %p134
    %p137 = scmp.ne.s32.totalorder %s120, %s136
    %p138 = scmp.eq.s32.totalorder %s18, 0
    %p139 = por %p137, %p138
    %s140 = ssub.s32 %s12, %s19
    %p141 = scmp.eq.s32.totalorder %s140, 0
    %s143 = sadd.s32 %s142, 1
    %s144 = scalar_select %p141, %s142, %s143
    %p147 = pneg %p141
    %p148 = scmp.eq.s32.totalorder %s12, 1
    %p149 = por %p147, %p148
    %p150 = scmp.ne.s32.totalorder %s142, %s145
    %p151 = scmp.eq.s32.totalorder %s12, 0
    %p152 = por %p150, %p151
    %p153 = scmp.ne.s32.totalorder %s142, %s145
    %p154 = scmp.eq.s32.totalorder %s17, 1
    %p155 = por %p153, %p154
    %p156 = scmp.ne.s32.totalorder %s145, %s146
    %p157 = scmp.eq.s32.totalorder %s17, 0
    %p158 = por %p156, %p157
    %p159 = scmp.ne.s32.totalorder %s145, %s146
    %p160 = scmp.eq.s32.totalorder %s18, 1
    %p161 = por %p159, %p160
    %p163 = scmp.ne.s32.totalorder %s146, %s162
    %p164 = scmp.eq.s32.totalorder %s18, 0
    %p165 = por %p163, %p164
    %p166 = scmp.le.s32.totalorder 1, %s12
    %p167 = scmp.lt.s32.totalorder %s12, 3
    %p168 = pnand %p166, %p167
    %p169 = pneg %p168
    // Predicated region
    $region9: #{tdnn_forward.2} parent=5 // pred_check
      _
    $region10: #{tdnn_forward.2} parent=5 // pred_check_branch
      %171 = sbr.rel (%p168) target = $region12
    $region11: #{tdnn_forward.2} parent=5 // pred_region
      %s172 = ssub.s32 %s12, 1
      // Predicated region
      $region13: #{tdnn_forward.2} parent=11 // pred_check
        %p173 = pneg %p59
      $region14: #{tdnn_forward.2} parent=11 // pred_check_branch
        %175 = sbr.rel (%p173) target = $region16
      $region15: #{tdnn_forward.2} parent=11 // pred_region
        _
      $region16: #{tdnn_forward.2} parent=11 // pred_fallthru
        _
      // Predicated region
      $region17: #{tdnn_forward.2} parent=11 // pred_check
        %p176 = pneg %p80
      $region18: #{tdnn_forward.2} parent=11 // pred_check_branch
        %178 = sbr.rel (%p176) target = $region20
      $region19: #{tdnn_forward.2} parent=11 // pred_region
        _
      $region20: #{tdnn_forward.2} parent=11 // pred_fallthru
        _
    $region12: #{tdnn_forward.2} parent=5 // pred_fallthru
      _
    %p179 = scmp.lt.s32.totalorder %s12, 2
    // Predicated region
    $region21: #{tdnn_forward.2} parent=5 // pred_check
      %p180 = pneg %p179
    $region22: #{tdnn_forward.2} parent=5 // pred_check_branch
      %182 = sbr.rel (%p180) target = $region24
    $region23: #{tdnn_forward.2} parent=5 // pred_region
      // Predicated region
      $region25: #{tdnn_forward.2} parent=23 // pred_check
        %p183 = pneg %p32
      $region26: #{tdnn_forward.2} parent=23 // pred_check_branch
        %185 = sbr.rel (%p183) target = $region28
      $region27: #{tdnn_forward.2} parent=23 // pred_region
        %p186 = scmp.lt.s32.totalorder %s12, 1
        %s187 = scalar_select %p186, %s12, 1
        %s188 = smul.addr %s187, 2
        %s189 = smul.addr %s188, 4
        %s190 = scalar_lea.vmem %s0, %s189
      $region28: #{tdnn_forward.2} parent=23 // pred_fallthru
        _
    $region24: #{tdnn_forward.2} parent=5 // pred_fallthru
      _
    %p191 = scmp.le.s32.totalorder 1, %s12
    %p192 = scmp.lt.s32.totalorder %s12, 3
    %p193 = pnand %p191, %p192
    %p194 = pneg %p193
    // Predicated region
    $region29: #{tdnn_forward.2} parent=5 // pred_check
      _
    $region30: #{tdnn_forward.2} parent=5 // pred_check_branch
      %196 = sbr.rel (%p193) target = $region32
    $region31: #{tdnn_forward.2} parent=5 // pred_region
      %s197 = ssub.s32 %s12, 1
      %p198 = scmp.lt.s32.totalorder %s17, 1
      %s199 = scalar_select %p198, %s17, 1
      %s200 = smul.addr %s199, 2
      %s201 = smul.addr %s200, 4
      %s202 = scalar_lea.vmem %s0, %s201
      %p203 = pneg %p38
      %p204 = pneg %p35
      %p205 = pneg %p59
      %p206 = pneg %p56
      %p207 = pneg %p80
      %p208 = pneg %p77
      %p209 = pneg %p106
      %p210 = pneg %p103
      %p211 = scmp.lt.s32.totalorder %s17, 1
      %s212 = scalar_select %p211, %s17, 1
      %s213 = smul.addr %s212, 2
      %s214 = smul.addr %s213, 8
      %s215 = scalar_lea.vmem %s3, %s214
      %p216 = pneg %p132
      %p217 = pneg %p129
      %p218 = scmp.lt.s32.totalorder %s17, 1
      %s219 = scalar_select %p218, %s17, 1
      %s220 = scalar_lea.vmem %s4, %s219
      %p221 = pneg %p158
      %p222 = pneg %p155
      %p223 = scmp.lt.s32.totalorder %s17, 1
      %s224 = scalar_select %p223, %s17, 1
      %s225 = scalar_lea.vmem %s5, %s224
      %p226 = scmp.lt.s32.totalorder %s17, 1
      %s227 = scalar_select %p226, %s17, 1
      %s228 = smul.addr %s227, 2
      %s229 = smul.addr %s228, 4
      %s230 = scalar_lea.vmem %s0, %s229
      %p231 = scmp.lt.s32.totalorder %s17, 1
      %s232 = scalar_select %p231, %s17, 1
      %s233 = smul.addr %s232, 2
      %s234 = smul.addr %s233, 8
      %s235 = scalar_lea.vmem %s3, %s234
      %p236 = scmp.lt.s32.totalorder %s17, 1
      %s237 = scalar_select %p236, %s17, 1
      %s238 = scalar_lea.vmem %s4, %s237
      %p239 = scmp.lt.s32.totalorder %s17, 1
      %s240 = scalar_select %p239, %s17, 1
      %s241 = scalar_lea.vmem %s5, %s240
      %v243 = vld [vmem:[%s2] sm:$0x1]
      %v245 = vlaneseq
      %v246 = vshrl.u32 %v245, 7
      %v247 = vsub.s32 0, %v246
      %v248 = vrot.slane %v243, %v247
      %v250 = vld [vmem:[%s230] sm:$0xf]
      %v251 = vld [vmem:[%s230 + $0x4] sm:$0x7]
      %v252 = vld [vmem:[%s1] sm:$0xf]
      %v253 = vld [vmem:[%s1 + $0x4] sm:$0xf]
      %v256 = vunpack.c.l.b16 %v250
      %v257 = vunpack.c.l.b16 %v251
      %v258 = vpack.c.b16 %v257, %v256
      %v261 = vunpack.c.l.b16 %v252
      %v262 = vunpack.c.l.b16 %v253
      %v263 = vpack.c.b16 %v262, %v261
      %vm265 = vcmask 130048
      %v267 = vsel %vm265, %v258, 0
      %269 = vmatprep.subr.bf16.mxu0 0
      %270 = vmatpush1.bf16.msra.mxu0 %v263
      %271 = vmatprep.subr.bf16.mxu0 0
      %272 = vmatpush1.bf16.msra.mxu0 0
      %273 = vmatprep.subr.bf16.mxu0 0
      %274 = vmatpush1.bf16.msra.mxu0 0
      %275 = vmatprep.subr.bf16.mxu0 0
      %276 = vmatpush1.bf16.msra.mxu0 0
      %277 = vmatprep.subr.bf16.mxu0 0
      %278 = vmatpush1.bf16.msra.mxu0 0
      %279 = vmatprep.subr.bf16.mxu0 0
      %280 = vmatpush1.bf16.msra.mxu0 0
      %281 = vmatprep.subr.bf16.mxu0 0
      %282 = vmatpush1.bf16.msra.mxu0 0
      %283 = vmatprep.subr.bf16.mxu0 0
      %284 = vmatpush1.bf16.msra.mxu0 0
      %285 = vmatprep.subr.bf16.mxu0 0
      %286 = vmatpush1.bf16.msra.mxu0 0
      %287 = vmatprep.subr.bf16.mxu0 0
      %288 = vmatpush1.bf16.msra.mxu0 0
      %289 = vmatprep.subr.bf16.mxu0 0
      %290 = vmatpush1.bf16.msra.mxu0 0
      %291 = vmatprep.subr.bf16.mxu0 0
      %292 = vmatpush1.bf16.msra.mxu0 0
      %293 = vmatprep.subr.bf16.mxu0 0
      %294 = vmatpush1.bf16.msra.mxu0 0
      %295 = vmatprep.subr.bf16.mxu0 0
      %296 = vmatpush1.bf16.msra.mxu0 0
      %297 = vmatprep.subr.bf16.mxu0 0
      %298 = vmatpush1.bf16.msra.mxu0 0
      %299 = vmatprep.subr.bf16.mxu0 0
      %300 = vmatpush1.bf16.msra.mxu0 0
      %301 = vmatprep.mubr.bf16.mxu0 0
      %302 = vmatmul.mubr.bf16.gmra.mrb[0].mxu0 %v267
      %v303 = vpop.f32.mrb[0].mxu0
      %v304 = vadd.f32 0.0, %v303
      %v305 = vpop.f32.mrb[0].mxu0
      %v306 = vpop.f32.mrb[0].mxu0
      %v307 = vadd.f32 0.0, %v306
      %v308 = vpop.f32.mrb[0].mxu0
      %309 = vdwg.mxu0
      %v310 = vadd.f32 %v248, %v304
      %v311 = vadd.f32 %v248, %v307
      %v312 = vld [vmem:[%s230 + $0x4] sm:$0xf]
      %s313 = scalar_lea.vmem %s1, 8
      %v314 = vld [vmem:[%s313] sm:$0xf]
      %v315 = vld [vmem:[%s313 + $0x4] sm:$0xf]
      %v317 = vunpack.c.l.b16 %v312
      %v318 = vpack.c.b16 %v317, %v256
      %v320 = vshrl.u32 %v318, 16
      %v322 = vshll.u32 %v318, 16
      %v324 = vrot.slane %v322, 1
      %v325 = vor.u32 %v320, %v324
      %v328 = vunpack.c.l.b16 %v314
      %v329 = vunpack.c.l.b16 %v315
      %v330 = vpack.c.b16 %v329, %v328
      %v333 = vsel %vm265, %v325, 0
      %335 = vmatprep.subr.bf16.mxu0 0
      %336 = vmatpush1.bf16.msra.mxu0 %v330
      %337 = vmatprep.subr.bf16.mxu0 0
      %338 = vmatpush1.bf16.msra.mxu0 0
      %339 = vmatprep.subr.bf16.mxu0 0
      %340 = vmatpush1.bf16.msra.mxu0 0
      %341 = vmatprep.subr.bf16.mxu0 0
      %342 = vmatpush1.bf16.msra.mxu0 0
      %343 = vmatprep.subr.bf16.mxu0 0
      %344 = vmatpush1.bf16.msra.mxu0 0
      %345 = vmatprep.subr.bf16.mxu0 0
      %346 = vmatpush1.bf16.msra.mxu0 0
      %347 = vmatprep.subr.bf16.mxu0 0
      %348 = vmatpush1.bf16.msra.mxu0 0
      %349 = vmatprep.subr.bf16.mxu0 0
      %350 = vmatpush1.bf16.msra.mxu0 0
      %351 = vmatprep.subr.bf16.mxu0 0
      %352 = vmatpush1.bf16.msra.mxu0 0
      %353 = vmatprep.subr.bf16.mxu0 0
      %354 = vmatpush1.bf16.msra.mxu0 0
      %355 = vmatprep.subr.bf16.mxu0 0
      %356 = vmatpush1.bf16.msra.mxu0 0
      %357 = vmatprep.subr.bf16.mxu0 0
      %358 = vmatpush1.bf16.msra.mxu0 0
      %359 = vmatprep.subr.bf16.mxu0 0
      %360 = vmatpush1.bf16.msra.mxu0 0
      %361 = vmatprep.subr.bf16.mxu0 0
      %362 = vmatpush1.bf16.msra.mxu0 0
      %363 = vmatprep.subr.bf16.mxu0 0
      %364 = vmatpush1.bf16.msra.mxu0 0
      %365 = vmatprep.subr.bf16.mxu0 0
      %366 = vmatpush1.bf16.msra.mxu0 0
      %367 = vmatprep.mubr.bf16.mxu0 0
      %368 = vmatmul.mubr.bf16.gmra.mrb[0].mxu0 %v333
      %v369 = vpop.f32.mrb[0].mxu0
      %v370 = vadd.f32 0.0, %v369
      %v371 = vpop.f32.mrb[0].mxu0
      %v372 = vpop.f32.mrb[0].mxu0
      %v373 = vadd.f32 0.0, %v372
      %v374 = vpop.f32.mrb[0].mxu0
      %375 = vdwg.mxu0
      %v376 = vadd.f32 %v310, %v370
      %v377 = vadd.f32 %v311, %v373
      %v378 = vld [vmem:[%s230] sm:$0xe]
      %s379 = scalar_lea.vmem %s1, 16
      %v380 = vld [vmem:[%s379] sm:$0xf]
      %v381 = vld [vmem:[%s379 + $0x4] sm:$0xf]
      %v383 = vunpack.c.l.b16 %v378
      %v384 = vpack.c.b16 %v317, %v383
      %v385 = vrot.slane %v384, 1
      %v388 = vunpack.c.l.b16 %v380
      %v389 = vunpack.c.l.b16 %v381
      %v390 = vpack.c.b16 %v389, %v388
      %v393 = vsel %vm265, %v385, 0
      %395 = vmatprep.subr.bf16.mxu0 0
      %396 = vmatpush1.bf16.msra.mxu0 %v390
      %397 = vmatprep.subr.bf16.mxu0 0
      %398 = vmatpush1.bf16.msra.mxu0 0
      %399 = vmatprep.subr.bf16.mxu0 0
      %400 = vmatpush1.bf16.msra.mxu0 0
      %401 = vmatprep.subr.bf16.mxu0 0
      %402 = vmatpush1.bf16.msra.mxu0 0
      %403 = vmatprep.subr.bf16.mxu0 0
      %404 = vmatpush1.bf16.msra.mxu0 0
      %405 = vmatprep.subr.bf16.mxu0 0
      %406 = vmatpush1.bf16.msra.mxu0 0
      %407 = vmatprep.subr.bf16.mxu0 0
      %408 = vmatpush1.bf16.msra.mxu0 0
      %409 = vmatprep.subr.bf16.mxu0 0
      %410 = vmatpush1.bf16.msra.mxu0 0
      %411 = vmatprep.subr.bf16.mxu0 0
      %412 = vmatpush1.bf16.msra.mxu0 0
      %413 = vmatprep.subr.bf16.mxu0 0
      %414 = vmatpush1.bf16.msra.mxu0 0
      %415 = vmatprep.subr.bf16.mxu0 0
      %416 = vmatpush1.bf16.msra.mxu0 0
      %417 = vmatprep.subr.bf16.mxu0 0
      %418 = vmatpush1.bf16.msra.mxu0 0
      %419 = vmatprep.subr.bf16.mxu0 0
      %420 = vmatpush1.bf16.msra.mxu0 0
      %421 = vmatprep.subr.bf16.mxu0 0
      %422 = vmatpush1.bf16.msra.mxu0 0
      %423 = vmatprep.subr.bf16.mxu0 0
      %424 = vmatpush1.bf16.msra.mxu0 0
      %425 = vmatprep.subr.bf16.mxu0 0
      %426 = vmatpush1.bf16.msra.mxu0 0
      %427 = vmatprep.mubr.bf16.mxu0 0
      %428 = vmatmul.mubr.bf16.gmra.mrb[0].mxu0 %v393
      %v429 = vpop.f32.mrb[0].mxu0
      %v430 = vadd.f32 0.0, %v429
      %v431 = vpop.f32.mrb[0].mxu0
      %v432 = vpop.f32.mrb[0].mxu0
      %v433 = vadd.f32 0.0, %v432
      %v434 = vpop.f32.mrb[0].mxu0
      %435 = vdwg.mxu0
      %v436 = vadd.f32 %v376, %v430
      %v437 = vadd.f32 %v377, %v433
      %v438 = vmax.f32 %v436, 0.0
      %v439 = vmax.f32 %v437, 0.0
      %440 = vst [vmem:[%s235] sm:$0xff] %v438
      %441 = vst [vmem:[%s235 + $0x8] sm:$0x3f] %v439
      %vm442 = vcmask 1045504
      %v443 = vsel %vm442, %v439, 0.0
      %v444 = vadd.f32 %v438, %v443
      %v445 = vrot.slane %v444, 4
      %v446 = vadd.f32 %v444, %v445
      %v447 = vrot.slane %v446, 2
      %v448 = vadd.f32 %v446, %v447
      %v449 = vrot.slane %v448, 1
      %v450 = vadd.f32 %v448, %v449
      %451 = vst [vmem:[%s238] sm:$0x1] %v450
      %v452 = vmul.f32 %v438, %v438
      %v453 = vmul.f32 %v439, %v439
      %v454 = vsel %vm442, %v453, 0.0
      %v455 = vadd.f32 %v452, %v454
      %v456 = vrot.slane %v455, 4
      %v457 = vadd.f32 %v455, %v456
      %v458 = vrot.slane %v457, 2
      %v459 = vadd.f32 %v457, %v458
      %v460 = vrot.slane %v459, 1
      %v461 = vadd.f32 %v459, %v460
      %462 = vst [vmem:[%s241] sm:$0x1] %v461
      %p463 = scmp.lt.s32.totalorder %s17, 1
      %s464 = scalar_select %p463, %s17, 1
      %s465 = smul.addr %s464, 2
      %s466 = smul.addr %s465, 8
      %s467 = scalar_lea.vmem %s3, %s466
      %p468 = scmp.lt.s32.totalorder %s17, 1
      %s469 = scalar_select %p468, %s17, 1
      %s470 = scalar_lea.vmem %s4, %s469
      %p471 = scmp.lt.s32.totalorder %s17, 1
      %s472 = scalar_select %p471, %s17, 1
      %s473 = scalar_lea.vmem %s5, %s472
      // Predicated region
      $region33: #{tdnn_forward.2} parent=31 // pred_check
        %p474 = pneg %p103
      $region34: #{tdnn_forward.2} parent=31 // pred_check_branch
        %476 = sbr.rel (%p474) target = $region36
      $region35: #{tdnn_forward.2} parent=31 // pred_region
        _
      $region36: #{tdnn_forward.2} parent=31 // pred_fallthru
        _
      // Predicated region
      $region37: #{tdnn_forward.2} parent=31 // pred_check
        %p477 = pneg %p129
      $region38: #{tdnn_forward.2} parent=31 // pred_check_branch
        %479 = sbr.rel (%p477) target = $region40
      $region39: #{tdnn_forward.2} parent=31 // pred_region
        _
      $region40: #{tdnn_forward.2} parent=31 // pred_fallthru
        _
      // Predicated region
      $region41: #{tdnn_forward.2} parent=31 // pred_check
        %p480 = pneg %p155
      $region42: #{tdnn_forward.2} parent=31 // pred_check_branch
        %482 = sbr.rel (%p480) target = $region44
      $region43: #{tdnn_forward.2} parent=31 // pred_region
        _
      $region44: #{tdnn_forward.2} parent=31 // pred_fallthru
        _
    $region32: #{tdnn_forward.2} parent=5 // pred_fallthru
      _
    %p483 = scmp.le.s32.totalorder 2, %s12
    // Predicated region
    $region45: #{tdnn_forward.2} parent=5 // pred_check
      %p484 = pneg %p483
    $region46: #{tdnn_forward.2} parent=5 // pred_check_branch
      %486 = sbr.rel (%p484) target = $region48
    $region47: #{tdnn_forward.2} parent=5 // pred_region
      %s487 = ssub.s32 %s12, 2
      // Predicated region
      $region49: #{tdnn_forward.2} parent=47 // pred_check
        %p488 = pneg %p109
      $region50: #{tdnn_forward.2} parent=47 // pred_check_branch
        %490 = sbr.rel (%p488) target = $region52
      $region51: #{tdnn_forward.2} parent=47 // pred_region
        %p491 = scmp.lt.s32.totalorder %s18, 1
        %s492 = scalar_select %p491, %s18, 1
        %s493 = smul.addr %s492, 2
        %s494 = smul.addr %s493, 8
        %s495 = scalar_lea.vmem %s3, %s494
      $region52: #{tdnn_forward.2} parent=47 // pred_fallthru
        _
      // Predicated region
      $region53: #{tdnn_forward.2} parent=47 // pred_check
        %p496 = pneg %p135
      $region54: #{tdnn_forward.2} parent=47 // pred_check_branch
        %498 = sbr.rel (%p496) target = $region56
      $region55: #{tdnn_forward.2} parent=47 // pred_region
        %p499 = scmp.lt.s32.totalorder %s18, 1
        %s500 = scalar_select %p499, %s18, 1
        %s501 = scalar_lea.vmem %s4, %s500
      $region56: #{tdnn_forward.2} parent=47 // pred_fallthru
        _
      // Predicated region
      $region57: #{tdnn_forward.2} parent=47 // pred_check
        %p502 = pneg %p161
      $region58: #{tdnn_forward.2} parent=47 // pred_check_branch
        %504 = sbr.rel (%p502) target = $region60
      $region59: #{tdnn_forward.2} parent=47 // pred_region
        %p505 = scmp.lt.s32.totalorder %s18, 1
        %s506 = scalar_select %p505, %s18, 1
        %s507 = scalar_lea.vmem %s5, %s506
      $region60: #{tdnn_forward.2} parent=47 // pred_fallthru
        _
    $region48: #{tdnn_forward.2} parent=5 // pred_fallthru
      _
  $region6: #{tdnn_forward.2} parent=0 // loop_footer
    %s16 = sadd.s32 1, %s12
  $region7: #{tdnn_forward.2} parent=0 // loop_footer_branch
    %11 = sbr.rel target = $region3
  $region8: #{tdnn_forward.2} parent=0 // loop_exit
    _

</llo_original>
